<compile_context>
chip_gen: v5e
topology: v5e:2x2
jax: 0.10.0
libtpu: 0.0.40
codegen_flags: <defaults>
</compile_context>

<pallas_src>
import jax
import jax.numpy as jnp
from jax import lax
from jax.experimental import pallas as pl
from jax.experimental.pallas import tpu as pltpu

EPS = 1e-5  # PyTorch InstanceNorm2d default


def _block_kernel(x_ref, w_ref, gb_ref, o_ref):
    # x_ref : (1, Cin, HW)    bf16
    # w_ref : (4*Cout, Cin)   bf16   row r = (ki*2 + kj)*Cout + co
    # gb_ref: (2*Cout, 1)     f32    rows [0:Cout]=gamma, [Cout:2*Cout]=beta
    # o_ref : (1, 4*Cout, HW) bf16
    x = x_ref[0]                       # (Cin, HW)
    w = w_ref[...]                     # (4*Cout, Cin)
    c4, hw = o_ref.shape[1], o_ref.shape[2]
    cout = c4 // 4

    # --- transposed conv (k=2, s=2): single MXU matmul, f32 accumulation ---
    y = jnp.dot(w, x, preferred_element_type=jnp.float32)   # (4*Cout, HW) f32

    inv_cnt = 1.0 / float(4 * hw)      # 1 / (2H * 2W), static constant

    def fold4(v):  # (4*Cout, 1) -> (Cout, 1): sum the 4 tap groups per channel
        return (v[0:cout] + v[cout:2 * cout]
                + v[2 * cout:3 * cout] + v[3 * cout:4 * cout])

    # --- instance-norm stats over all 2H*2W output positions (two-pass) ---
    s1 = jnp.sum(y, axis=1, keepdims=True)                    # (4*Cout, 1) XLU
    mean = fold4(s1) * inv_cnt                                 # (Cout, 1)
    mean4 = jnp.concatenate([mean, mean, mean, mean], axis=0)  # (4*Cout, 1)

    d = y - mean4
    s2 = jnp.sum(d * d, axis=1, keepdims=True)                 # (4*Cout, 1)
    var = fold4(s2) * inv_cnt                                  # (Cout, 1)
    inv = lax.rsqrt(var + EPS)                                 # EUP

    gamma = gb_ref[0:cout]             # (Cout, 1) f32
    beta = gb_ref[cout:2 * cout]       # (Cout, 1) f32
    scale = inv * gamma
    scale4 = jnp.concatenate([scale, scale, scale, scale], axis=0)  # (4*Cout,1)
    beta4 = jnp.concatenate([beta, beta, beta, beta], axis=0)

    # --- normalize + affine + SiLU, lane-dense store ---
    z = d * scale4 + beta4
    z = z * jax.nn.sigmoid(z)
    o_ref[0] = z.astype(o_ref.dtype)


def transpose_conv_block(x_flat, w_cat, gb):
    """x_flat: (N, Cin, H*W) bf16; w_cat: (4*Cout, Cin) bf16; gb: (2*Cout,1) f32.
    Returns the tap-major slab (N, 4*Cout, H*W) in bf16."""
    N, Cin, HW = x_flat.shape
    C4 = w_cat.shape[0]
    GB = gb.shape[0]
    return pl.pallas_call(
        _block_kernel,
        out_shape=jax.ShapeDtypeStruct((N, C4, HW), jnp.bfloat16),
        grid_spec=pltpu.PrefetchScalarGridSpec(
            num_scalar_prefetch=0,
            grid=(N,),
            in_specs=[
                pl.BlockSpec((1, Cin, HW), lambda n: (n, 0, 0)),
                pl.BlockSpec((C4, Cin), lambda n: (0, 0)),
                pl.BlockSpec((GB, 1), lambda n: (0, 0)),
            ],
            out_specs=pl.BlockSpec((1, C4, HW), lambda n: (n, 0, 0)),
        ),
        compiler_params=pltpu.CompilerParams(
            dimension_semantics=("parallel",)),   # batch shards across v7x TCs
    )(x_flat, w_cat, gb)


def make_cat_weight(w_pt, groups):
    """PyTorch ConvTranspose2d weight (Cin, Cout//g, 2, 2) -> dense tap-major
    block-diagonal (4*Cout, Cin) matrix; row r = (ki*2 + kj)*Cout + co."""
    Cin, Cpg, kh, kw = w_pt.shape
    Cout = Cpg * groups
    Cin_g = Cin // groups
    wd = jnp.zeros((kh, kw, Cout, Cin), jnp.float32)
    for g in range(groups):
        blk = w_pt[g * Cin_g:(g + 1) * Cin_g]         # (Cin_g, Cpg, 2, 2)
        blk = jnp.transpose(blk, (2, 3, 1, 0))         # (2, 2, Cpg, Cin_g)
        wd = wd.at[:, :, g * Cpg:(g + 1) * Cpg,
                   g * Cin_g:(g + 1) * Cin_g].set(blk)
    return wd.reshape(kh * kw * Cout, Cin)


def slab_to_nchw(out_slab, N, Cout, H, W):
    """(N, 4*Cout, H*W) tap-major -> PyTorch NCHW (N, Cout, 2H, 2W)."""
    y6 = out_slab.reshape(N, 2, 2, Cout, H, W)         # (n, ki, kj, co, i, j)
    return jnp.transpose(y6, (0, 3, 4, 1, 5, 2)).reshape(N, Cout, 2 * H, 2 * W)


def reference_nchw(x_flat_f32, w_cat_f32, gamma, beta, N, Cout, H, W):
    """Pure-JAX f32 reference from the same (bf16-rounded) inputs."""
    y = jnp.einsum('rc,ncp->nrp', w_cat_f32, x_flat_f32)   # (N, 4*Cout, HW)
    y = slab_to_nchw(y, N, Cout, H, W)                     # (N, Cout, 2H, 2W)
    mean = jnp.mean(y, axis=(2, 3), keepdims=True)
    var = jnp.mean((y - mean) ** 2, axis=(2, 3), keepdims=True)
    z = (y - mean) * lax.rsqrt(var + EPS)
    z = z * gamma.reshape(1, -1, 1, 1) + beta.reshape(1, -1, 1, 1)
    return z * jax.nn.sigmoid(z)


if __name__ == "__main__":
    # Module config: in_channels=4, out_channels=8, groups=2, bias=True,
    # norm='instance_norm', activation=None (SiLU).
    N, Cin, H, W = 2, 4, 16, 16
    Cout, groups = 8, 2

    key = jax.random.PRNGKey(0)
    k1, k2, k3, k4 = jax.random.split(key, 4)
    x_nchw = jax.random.normal(k1, (N, Cin, H, W), jnp.float32)      # PyTorch NCHW
    w_pt = 0.5 * jax.random.normal(k2, (Cin, Cout // groups, 2, 2), jnp.float32)
    gamma = 1.0 + 0.1 * jax.random.normal(k3, (Cout,), jnp.float32)  # affine weight
    beta = 0.1 * jax.random.normal(k4, (Cout,), jnp.float32)         # affine bias

    # Layout / dtype prep outside the kernel: NCHW flattens directly to
    # (N, Cin, H*W); weight becomes the dense tap-major (4*Cout, Cin) matrix.
    x_flat = x_nchw.reshape(N, Cin, H * W).astype(jnp.bfloat16)
    w_cat = make_cat_weight(w_pt, groups).astype(jnp.bfloat16)
    gb = jnp.concatenate([gamma, beta]).reshape(2 * Cout, 1)          # f32

    out_slab = jax.block_until_ready(transpose_conv_block(x_flat, w_cat, gb))
    out_nchw = slab_to_nchw(out_slab.astype(jnp.float32), N, Cout, H, W)
    assert out_nchw.shape == (N, Cout, 2 * H, 2 * W)

    ref = reference_nchw(x_flat.astype(jnp.float32), w_cat.astype(jnp.float32),
                         gamma, beta, N, Cout, H, W)
    err = float(jnp.max(jnp.abs(out_nchw - ref)))
    assert err < 5e-2, f"max abs error {err}"   # headroom for bf16 output store
    print("KERNEL_OK")
</pallas_src>

<mosaic_0001>
module attributes {stable_mosaic.version = 11 : i64} {
  func.func @_block_kernel(%arg0: i32, %arg1: memref<1x4x256xbf16, #tpu.memory_space<vmem>>, %arg2: memref<32x4xbf16, #tpu.memory_space<vmem>>, %arg3: memref<16x1xf32, #tpu.memory_space<vmem>>, %arg4: memref<1x32x256xbf16, #tpu.memory_space<vmem>>) attributes {dimension_semantics = [#tpu.dimension_semantics<parallel>], iteration_bounds = array<i64: 2>, scalar_prefetch = 0 : i64, scratch_operands = 0 : i64, tpu.core_type = #tpu.core_type<tc>, window_params = [{transform_indices = @transform_0, window_bounds = array<i64: 1, 4, 256>}, {pipeline_mode = #tpu.pipeline_mode<synchronous>, transform_indices = @transform_1, window_bounds = array<i64: 32, 4>}, {pipeline_mode = #tpu.pipeline_mode<synchronous>, transform_indices = @transform_2, window_bounds = array<i64: 16, 1>}, {transform_indices = @transform_3, window_bounds = array<i64: 1, 32, 256>}]} {
    %c0 = arith.constant 0 : index
    %c0_0 = arith.constant 0 : index
    %c0_1 = arith.constant 0 : index
    %0 = vector.load %arg1[%c0, %c0_0, %c0_1] : memref<1x4x256xbf16, #tpu.memory_space<vmem>>, vector<1x4x256xbf16>
    %1 = vector.shape_cast %0 : vector<1x4x256xbf16> to vector<4x256xbf16>
    %c0_2 = arith.constant 0 : index
    %c0_3 = arith.constant 0 : index
    %2 = vector.load %arg2[%c0_2, %c0_3] : memref<32x4xbf16, #tpu.memory_space<vmem>>, vector<32x4xbf16>
    %cst = arith.constant dense<0.000000e+00> : vector<32x256xf32>
    %3 = tpu.matmul %2, %1, %cst {dimension_numbers = #tpu.dot_dimension_numbers<[1], [0], [0], [1], [0, 0, 1, 1], [], []>} : vector<32x4xbf16>, vector<4x256xbf16>, vector<32x256xf32> -> vector<32x256xf32>
    %cst_4 = arith.constant dense<0.000000e+00> : vector<32xf32>
    %4 = vector.multi_reduction <add>, %3, %cst_4 [1] : vector<32x256xf32> to vector<32xf32>
    %5 = vector.shape_cast %4 : vector<32xf32> to vector<32x1xf32>
    %6 = vector.extract_strided_slice %5 {offsets = [0, 0], sizes = [8, 1], strides = [1, 1]} : vector<32x1xf32> to vector<8x1xf32>
    %7 = vector.extract_strided_slice %5 {offsets = [8, 0], sizes = [8, 1], strides = [1, 1]} : vector<32x1xf32> to vector<8x1xf32>
    %8 = arith.addf %6, %7 : vector<8x1xf32>
    %9 = vector.extract_strided_slice %5 {offsets = [16, 0], sizes = [8, 1], strides = [1, 1]} : vector<32x1xf32> to vector<8x1xf32>
    %10 = arith.addf %8, %9 : vector<8x1xf32>
    %11 = vector.extract_strided_slice %5 {offsets = [24, 0], sizes = [8, 1], strides = [1, 1]} : vector<32x1xf32> to vector<8x1xf32>
    %12 = arith.addf %10, %11 : vector<8x1xf32>
    %cst_5 = arith.constant 9.765625E-4 : f32
    %13 = vector.broadcast %cst_5 : f32 to vector<8x1xf32>
    %14 = arith.mulf %12, %13 : vector<8x1xf32>
    %15 = tpu.concatenate %14, %14, %14, %14 in 0 : vector<8x1xf32>, vector<8x1xf32>, vector<8x1xf32>, vector<8x1xf32> -> vector<32x1xf32>
    %16 = vector.broadcast %15 : vector<32x1xf32> to vector<32x256xf32>
    %17 = arith.subf %3, %16 : vector<32x256xf32>
    %18 = arith.mulf %17, %17 : vector<32x256xf32>
    %cst_6 = arith.constant dense<0.000000e+00> : vector<32xf32>
    %19 = vector.multi_reduction <add>, %18, %cst_6 [1] : vector<32x256xf32> to vector<32xf32>
    %20 = vector.shape_cast %19 : vector<32xf32> to vector<32x1xf32>
    %21 = vector.extract_strided_slice %20 {offsets = [0, 0], sizes = [8, 1], strides = [1, 1]} : vector<32x1xf32> to vector<8x1xf32>
    %22 = vector.extract_strided_slice %20 {offsets = [8, 0], sizes = [8, 1], strides = [1, 1]} : vector<32x1xf32> to vector<8x1xf32>
    %23 = arith.addf %21, %22 : vector<8x1xf32>
    %24 = vector.extract_strided_slice %20 {offsets = [16, 0], sizes = [8, 1], strides = [1, 1]} : vector<32x1xf32> to vector<8x1xf32>
    %25 = arith.addf %23, %24 : vector<8x1xf32>
    %26 = vector.extract_strided_slice %20 {offsets = [24, 0], sizes = [8, 1], strides = [1, 1]} : vector<32x1xf32> to vector<8x1xf32>
    %27 = arith.addf %25, %26 : vector<8x1xf32>
    %cst_7 = arith.constant 9.765625E-4 : f32
    %28 = vector.broadcast %cst_7 : f32 to vector<8x1xf32>
    %29 = arith.mulf %27, %28 : vector<8x1xf32>
    %cst_8 = arith.constant 9.99999974E-6 : f32
    %30 = vector.broadcast %cst_8 : f32 to vector<8x1xf32>
    %31 = arith.addf %29, %30 : vector<8x1xf32>
    %32 = math.rsqrt %31 : vector<8x1xf32>
    %c0_9 = arith.constant 0 : index
    %c0_10 = arith.constant 0 : index
    %33 = vector.load %arg3[%c0_9, %c0_10] : memref<16x1xf32, #tpu.memory_space<vmem>>, vector<8x1xf32>
    %c8 = arith.constant 8 : index
    %c0_11 = arith.constant 0 : index
    %34 = vector.load %arg3[%c8, %c0_11] : memref<16x1xf32, #tpu.memory_space<vmem>>, vector<8x1xf32>
    %35 = arith.mulf %32, %33 : vector<8x1xf32>
    %36 = tpu.concatenate %35, %35, %35, %35 in 0 : vector<8x1xf32>, vector<8x1xf32>, vector<8x1xf32>, vector<8x1xf32> -> vector<32x1xf32>
    %37 = tpu.concatenate %34, %34, %34, %34 in 0 : vector<8x1xf32>, vector<8x1xf32>, vector<8x1xf32>, vector<8x1xf32> -> vector<32x1xf32>
    %38 = vector.broadcast %36 : vector<32x1xf32> to vector<32x256xf32>
    %39 = arith.mulf %17, %38 : vector<32x256xf32>
    %40 = vector.broadcast %37 : vector<32x1xf32> to vector<32x256xf32>
    %41 = arith.addf %39, %40 : vector<32x256xf32>
    %42 = arith.negf %41 : vector<32x256xf32>
    %43 = math.exp %42 : vector<32x256xf32>
    %cst_12 = arith.constant 1.000000e+00 : f32
    %44 = vector.broadcast %cst_12 : f32 to vector<32x256xf32>
    %45 = arith.addf %44, %43 : vector<32x256xf32>
    %46 = arith.divf %44, %45 : vector<32x256xf32>
    %47 = arith.mulf %41, %46 : vector<32x256xf32>
    %48 = arith.truncf %47 : vector<32x256xf32> to vector<32x256xbf16>
    %c0_13 = arith.constant 0 : index
    %c0_14 = arith.constant 0 : index
    %c0_15 = arith.constant 0 : index
    %49 = vector.load %arg4[%c0_13, %c0_14, %c0_15] : memref<1x32x256xbf16, #tpu.memory_space<vmem>>, vector<1x32x256xbf16>
    %50 = vector.shape_cast %49 : vector<1x32x256xbf16> to vector<32x256xbf16>
    %51 = vector.shape_cast %48 : vector<32x256xbf16> to vector<1x32x256xbf16>
    tpu.vector_store %arg4[%c0_13, %c0_14, %c0_15], %51 {strides = array<i32>} : memref<1x32x256xbf16, #tpu.memory_space<vmem>>, vector<1x32x256xbf16>,
    return
  }
  func.func @transform_0(%arg0: i32) -> (i32, i32, i32) {
    %c0_i32 = arith.constant 0 : i32
    %c0_i32_0 = arith.constant 0 : i32
    %c0_i32_1 = arith.constant 0 : i32
    return %arg0, %c0_i32, %c0_i32_0 : i32, i32, i32
  }
  func.func @transform_1(%arg0: i32) -> (i32, i32) {
    %c0_i32 = arith.constant 0 : i32
    %c0_i32_0 = arith.constant 0 : i32
    %c0_i32_1 = arith.constant 0 : i32
    return %c0_i32, %c0_i32_0 : i32, i32
  }
  func.func @transform_2(%arg0: i32) -> (i32, i32) {
    %c0_i32 = arith.constant 0 : i32
    %c0_i32_0 = arith.constant 0 : i32
    %c0_i32_1 = arith.constant 0 : i32
    return %c0_i32, %c0_i32_0 : i32, i32
  }
  func.func @transform_3(%arg0: i32) -> (i32, i32, i32) {
    %c0_i32 = arith.constant 0 : i32
    %c0_i32_0 = arith.constant 0 : i32
    %c0_i32_1 = arith.constant 0 : i32
    return %arg0, %c0_i32, %c0_i32_0 : i32, i32, i32
  }
}

</mosaic_0001>

<llo_original>
// kernel: tpu_custom_call.1
$region0: #{tpu_custom_call.1}
  #allocation0 [shape = 'u32[]', space=smem, size = 0x4, offset = 0x4, fixed_abs, tag = 'smem constant byte address 0x4 - core index']
  #allocation1 [shape = 'u32[72,128]{1,0:T(1,128)}', space=vmem, size = 0x9000, scoped, tag = 'internal scratch']
  %s0 = inlined_call_operand.vmem [shape: bf16[2,4,256], index: 0, kind: input, shape index: {}]
  %s1 = inlined_call_operand.vmem [shape: bf16[32,4], index: 1, kind: input, shape index: {}]
  %s2 = inlined_call_operand.vmem [shape: f32[16,1], index: 2, kind: input, shape index: {}]
  %s3 = inlined_call_operand.hbm [shape: bf16[2,32,256], index: 3, kind: output, shape index: {}]
  %s4 = sld [smem:[#allocation0]]
  $region45: #{tpu_custom_call.1} parent=0
    _
  %s6 = ssub.s32 1, %s4
  %s7 = scalar_select 0, %s6, %s4
  $region1: #{tpu_custom_call.1} parent=0
    #allocation2 [shape = 'u8[32768]{0}', space=vmem, size = 0x8000, scoped, tag = 'output window, operand 0']
    #allocation3 [shape = 's32[2]{0}', space=sflag, size = 0x8, scoped, tag = 'scoped memory for tpu_custom_call.1']
    %8 = vsyncpa [#allocation3], 0
    %s9 = scalar_lea.sflag [#allocation3], 1
    %10 = vsyncpa %s9, 0
    loop: start=0, step=1, limit=4
    $region2: #{tpu_custom_call.1} parent=1 // loop_pre_header
      _
    $region3: #{tpu_custom_call.1} parent=1 // loop_header
      %s12 = sphi 0, %s16
      %p13 = scmp.ge.s32.totalorder %s12, 4
      %s22 = sphi 0, %s24
      %s25 = sphi 0, %s22
      %s26 = sphi 0, %s25
      %s42 = sphi 0, %s26
      %s46 = sphi 0, %s46
      %s48 = sphi 0, %s46
      %s49 = sphi 0, %s48
      %s63 = sphi 0, %s49
      %s67 = sphi 0, %s67
      %s69 = sphi 0, %s67
      %s70 = sphi 0, %s69
      %s84 = sphi 0, %s70
      %s90 = sphi 0, %s92
      %s93 = sphi 0, %s90
      %s94 = sphi 0, %s93
      %s110 = sphi 0, %s94
    $region4: #{tpu_custom_call.1} parent=1 // loop_header_branch
      %15 = sbr.rel (%p13) target = $region8
    $region5: #{tpu_custom_call.1} parent=1 // loop_body
      %s17 = ssub.s32 %s12, 1
      %s18 = ssub.s32 %s12, 2
      %s19 = sadd.s32 %s12, 1
      %s20 = ssub.s32 %s12, %s19
      %p21 = scmp.eq.s32.totalorder %s20, 0
      %s23 = sadd.s32 %s22, 1
      %s24 = scalar_select %p21, %s22, %s23
      %p27 = pneg %p21
      %p28 = scmp.eq.s32.totalorder %s12, 1
      %p29 = por %p27, %p28
      %p30 = scmp.ne.s32.totalorder %s22, %s25
      %p31 = scmp.eq.s32.totalorder %s12, 0
      %p32 = por %p30, %p31
      %p33 = scmp.ne.s32.totalorder %s22, %s25
      %p34 = scmp.eq.s32.totalorder %s17, 1
      %p35 = por %p33, %p34
      %p36 = scmp.ne.s32.totalorder %s25, %s26
      %p37 = scmp.eq.s32.totalorder %s17, 0
      %p38 = por %p36, %p37
      %p39 = scmp.ne.s32.totalorder %s25, %s26
      %p40 = scmp.eq.s32.totalorder %s18, 1
      %p41 = por %p39, %p40
      %p43 = scmp.ne.s32.totalorder %s26, %s42
      %p44 = scmp.eq.s32.totalorder %s18, 0
      %p45 = por %p43, %p44
      %s47 = sadd.s32 %s46, 1
      %p50 = scmp.eq.s32.totalorder %s12, 1
      %p51 = scmp.ne.s32.totalorder %s46, %s48
      %p52 = scmp.eq.s32.totalorder %s12, 0
      %p53 = por %p51, %p52
      %p54 = scmp.ne.s32.totalorder %s46, %s48
      %p55 = scmp.eq.s32.totalorder %s17, 1
      %p56 = por %p54, %p55
      %p57 = scmp.ne.s32.totalorder %s48, %s49
      %p58 = scmp.eq.s32.totalorder %s17, 0
      %p59 = por %p57, %p58
      %p60 = scmp.ne.s32.totalorder %s48, %s49
      %p61 = scmp.eq.s32.totalorder %s18, 1
      %p62 = por %p60, %p61
      %p64 = scmp.ne.s32.totalorder %s49, %s63
      %p65 = scmp.eq.s32.totalorder %s18, 0
      %p66 = por %p64, %p65
      %s68 = sadd.s32 %s67, 1
      %p71 = scmp.eq.s32.totalorder %s12, 1
      %p72 = scmp.ne.s32.totalorder %s67, %s69
      %p73 = scmp.eq.s32.totalorder %s12, 0
      %p74 = por %p72, %p73
      %p75 = scmp.ne.s32.totalorder %s67, %s69
      %p76 = scmp.eq.s32.totalorder %s17, 1
      %p77 = por %p75, %p76
      %p78 = scmp.ne.s32.totalorder %s69, %s70
      %p79 = scmp.eq.s32.totalorder %s17, 0
      %p80 = por %p78, %p79
      %p81 = scmp.ne.s32.totalorder %s69, %s70
      %p82 = scmp.eq.s32.totalorder %s18, 1
      %p83 = por %p81, %p82
      %p85 = scmp.ne.s32.totalorder %s70, %s84
      %p86 = scmp.eq.s32.totalorder %s18, 0
      %p87 = por %p85, %p86
      %s88 = ssub.s32 %s12, %s19
      %p89 = scmp.eq.s32.totalorder %s88, 0
      %s91 = sadd.s32 %s90, 1
      %s92 = scalar_select %p89, %s90, %s91
      %p95 = pneg %p89
      %p96 = scmp.eq.s32.totalorder %s12, 1
      %p97 = por %p95, %p96
      %p98 = scmp.ne.s32.totalorder %s90, %s93
      %p99 = scmp.eq.s32.totalorder %s12, 0
      %p100 = por %p98, %p99
      %p101 = scmp.ne.s32.totalorder %s90, %s93
      %p102 = scmp.eq.s32.totalorder %s17, 1
      %p103 = por %p101, %p102
      %p104 = scmp.ne.s32.totalorder %s93, %s94
      %p105 = scmp.eq.s32.totalorder %s17, 0
      %p106 = por %p104, %p105
      %p107 = scmp.ne.s32.totalorder %s93, %s94
      %p108 = scmp.eq.s32.totalorder %s18, 1
      %p109 = por %p107, %p108
      %p111 = scmp.ne.s32.totalorder %s94, %s110
      %p112 = scmp.eq.s32.totalorder %s18, 0
      %p113 = por %p111, %p112
      %p114 = scmp.le.s32.totalorder 1, %s12
      %p115 = scmp.lt.s32.totalorder %s12, 3
      %p116 = pnand %p114, %p115
      %p117 = pneg %p116
      // Predicated region
      $region9: #{tpu_custom_call.1} parent=5 // pred_check
        _
      $region10: #{tpu_custom_call.1} parent=5 // pred_check_branch
        %119 = sbr.rel (%p116) target = $region12
      $region11: #{tpu_custom_call.1} parent=5 // pred_region
        %s120 = ssub.s32 %s12, 1
        // Predicated region
        $region13: #{tpu_custom_call.1} parent=11 // pred_check
          %p121 = pneg %p59
        $region14: #{tpu_custom_call.1} parent=11 // pred_check_branch
          %123 = sbr.rel (%p121) target = $region16
        $region15: #{tpu_custom_call.1} parent=11 // pred_region
          _
        $region16: #{tpu_custom_call.1} parent=11 // pred_fallthru
          _
        // Predicated region
        $region17: #{tpu_custom_call.1} parent=11 // pred_check
          %p124 = pneg %p80
        $region18: #{tpu_custom_call.1} parent=11 // pred_check_branch
          %126 = sbr.rel (%p124) target = $region20
        $region19: #{tpu_custom_call.1} parent=11 // pred_region
          _
        $region20: #{tpu_custom_call.1} parent=11 // pred_fallthru
          _
      $region12: #{tpu_custom_call.1} parent=5 // pred_fallthru
        _
      %p127 = scmp.lt.s32.totalorder %s12, 2
      // Predicated region
      $region21: #{tpu_custom_call.1} parent=5 // pred_check
        %p128 = pneg %p127
      $region22: #{tpu_custom_call.1} parent=5 // pred_check_branch
        %130 = sbr.rel (%p128) target = $region24
      $region23: #{tpu_custom_call.1} parent=5 // pred_region
        // Predicated region
        $region25: #{tpu_custom_call.1} parent=23 // pred_check
          %p131 = pneg %p32
        $region26: #{tpu_custom_call.1} parent=23 // pred_check_branch
          %133 = sbr.rel (%p131) target = $region28
        $region27: #{tpu_custom_call.1} parent=23 // pred_region
          %p134 = scmp.lt.s32.totalorder %s12, 1
          %s135 = scalar_select %p134, %s12, 1
          %s136 = smul.addr %s135, 2
          %s137 = smul.addr %s136, 2
          %s138 = scalar_lea.vmem %s0, %s137
        $region28: #{tpu_custom_call.1} parent=23 // pred_fallthru
          _
      $region24: #{tpu_custom_call.1} parent=5 // pred_fallthru
        _
      %p139 = scmp.le.s32.totalorder 1, %s12
      %p140 = scmp.lt.s32.totalorder %s12, 3
      %p141 = pnand %p139, %p140
      %p142 = pneg %p141
      // Predicated region
      $region29: #{tpu_custom_call.1} parent=5 // pred_check
        _
      $region30: #{tpu_custom_call.1} parent=5 // pred_check_branch
        %144 = sbr.rel (%p141) target = $region32
      $region31: #{tpu_custom_call.1} parent=5 // pred_region
        %s145 = ssub.s32 %s12, 1
        %p146 = scmp.lt.s32.totalorder %s17, 1
        %s147 = scalar_select %p146, %s17, 1
        %s148 = smul.addr %s147, 2
        %s149 = smul.addr %s148, 2
        %s150 = scalar_lea.vmem %s0, %s149
        %p151 = pneg %p38
        %p152 = pneg %p35
        %p153 = pneg %p59
        %p154 = pneg %p56
        %p155 = pneg %p80
        %p156 = pneg %p77
        %p157 = pneg %p106
        %p158 = pneg %p103
        %s159 = sand.u32 %s93, 1
        %s160 = scalar_lea.sflag [#allocation3], %s159
        %s161 = sand.u32 %s93, 1
        %s162 = smul.addr %s161, 32
        %s163 = scalar_lea.vmem [#allocation2], %s162
        %p164 = scmp.lt.s32.totalorder %s17, 1
        %s165 = scalar_select %p164, %s17, 1
        %s166 = smul.addr %s165, 2
        %s167 = smul.addr %s166, 2
        %s168 = scalar_lea.vmem %s0, %s167
        %v170 = vld [vmem:[%s168] sm:$0xf]
        %v171 = vld [vmem:[%s1] sm:$0xf]
        %v172 = vld [vmem:[%s1 + $0x4] sm:$0xf]
        %v173 = vld [vmem:[%s1 + $0x8] sm:$0xf]
        %v174 = vld [vmem:[%s1 + $0xc] sm:$0xf]
        %v179 = vunpack.c.l.b16 %v171
        %v180 = vunpack.c.l.b16 %v172
        %v181 = vunpack.c.l.b16 %v173
        %v182 = vunpack.c.l.b16 %v174
        %v183 = vpack.c.b16 %v180, %v179
        %v184 = vpack.c.b16 %v182, %v181
        %186 = vst [vmem:[#allocation1] ss:$4 sm:$0xff] %v170
        %v187 = vld.sshfl [vmem:[#allocation1] sm:$0xff pattern:$0x73625140]
        %v188 = vld.sshfl [vmem:[#allocation1 + $0x8] sm:$0xff pattern:$0x73625140]
        %vm189 = vcmask 31744
        %v191 = vsel %vm189, %v183, 0
        %v194 = vsel %vm189, %v184, 0
        %vm196 = vcmask 1041408
        %v197 = vsel %vm196, %v187, 0
        %v199 = vsel %vm196, %v188, 0
        %201 = vmatpush.bf16.msra.mxu0 0
        %202 = vmatpush.bf16.msra.mxu0 0
        %203 = vmatpush.bf16.msra.mxu0 0
        %204 = vmatpush.bf16.msra.mxu0 0
        %205 = vmatpush.bf16.msra.mxu0 0
        %206 = vmatpush.bf16.msra.mxu0 0
        %207 = vmatpush.bf16.msra.mxu0 0
        %208 = vmatpush.bf16.msra.mxu0 %v197
        %209 = vmatmul.bf16.gmra.mxu0 %v191
        %v210 = vpop.f32.mrf.mxu0
        %v211 = vadd.f32 0.0, %v210
        %v212 = vpop.f32.mrf.mxu0
        %v213 = vadd.f32 0.0, %v212
        %214 = vmatmul.bf16.gmra.mxu0 %v194
        %v215 = vpop.f32.mrf.mxu0
        %v216 = vadd.f32 0.0, %v215
        %v217 = vpop.f32.mrf.mxu0
        %v218 = vadd.f32 0.0, %v217
        %219 = vdwg.mxu0
        %220 = vmatpush.bf16.msra.mxu0 0
        %221 = vmatpush.bf16.msra.mxu0 0
        %222 = vmatpush.bf16.msra.mxu0 0
        %223 = vmatpush.bf16.msra.mxu0 0
        %224 = vmatpush.bf16.msra.mxu0 0
        %225 = vmatpush.bf16.msra.mxu0 0
        %226 = vmatpush.bf16.msra.mxu0 0
        %227 = vmatpush.bf16.msra.mxu0 %v199
        %228 = vmatmul.bf16.gmra.mxu0 %v191
        %v229 = vpop.f32.mrf.mxu0
        %v230 = vadd.f32 0.0, %v229
        %v231 = vpop.f32.mrf.mxu0
        %v232 = vadd.f32 0.0, %v231
        %233 = vmatmul.bf16.gmra.mxu0 %v194
        %v234 = vpop.f32.mrf.mxu0
        %v235 = vadd.f32 0.0, %v234
        %v236 = vpop.f32.mrf.mxu0
        %v237 = vadd.f32 0.0, %v236
        %238 = vdwg.mxu0
        %v239 = vadd.f32 %v211, %v230
        %240 = vadd.xlane.f32.xlu0 %v239
        %v241 = vpop.xlane.xlu0 %240
        %v242 = vadd.f32 %v213, %v232
        %243 = vadd.xlane.f32.xlu0 %v242
        %v244 = vpop.xlane.xlu0 %243
        %v245 = vadd.f32 %v216, %v235
        %246 = vadd.xlane.f32.xlu0 %v245
        %v247 = vpop.xlane.xlu0 %246
        %v248 = vadd.f32 %v218, %v237
        %249 = vadd.xlane.f32.xlu0 %v248
        %v250 = vpop.xlane.xlu0 %249
        %v251 = vadd.f32 %v241, %v244
        %v252 = vadd.f32 %v251, %v247
        %v253 = vadd.f32 %v252, %v250
        %v254 = vmul.f32 %v253, 0.0009765625
        %256 = vset.pattern.permute.xlu0 0
        %257 = vperm.xlu0 %256, %v254
        %v258 = vpop.permute.xlu0 %257
        %v260 = vsub.f32 %v211, %v258
        %v261 = vsub.f32 %v230, %v258
        %v262 = vsub.f32 %v213, %v258
        %v263 = vsub.f32 %v232, %v258
        %v264 = vsub.f32 %v216, %v258
        %v265 = vsub.f32 %v235, %v258
        %v266 = vsub.f32 %v218, %v258
        %v267 = vsub.f32 %v237, %v258
        %v268 = vmul.f32 %v260, %v260
        %v269 = vmul.f32 %v261, %v261
        %v270 = vmul.f32 %v262, %v262
        %v271 = vmul.f32 %v263, %v263
        %v272 = vmul.f32 %v264, %v264
        %v273 = vmul.f32 %v265, %v265
        %v274 = vmul.f32 %v266, %v266
        %v275 = vmul.f32 %v267, %v267
        %v276 = vadd.f32 %v268, %v269
        %277 = vadd.xlane.f32.xlu0 %v276
        %v278 = vpop.xlane.xlu0 %277
        %v279 = vadd.f32 %v270, %v271
        %280 = vadd.xlane.f32.xlu0 %v279
        %v281 = vpop.xlane.xlu0 %280
        %v282 = vadd.f32 %v272, %v273
        %283 = vadd.xlane.f32.xlu0 %v282
        %v284 = vpop.xlane.xlu0 %283
        %v285 = vadd.f32 %v274, %v275
        %286 = vadd.xlane.f32.xlu0 %v285
        %v287 = vpop.xlane.xlu0 %286
        %v288 = vadd.f32 %v278, %v281
        %v289 = vadd.f32 %v288, %v284
        %v290 = vadd.f32 %v289, %v287
        %v291 = vmul.f32 %v290, 0.0009765625
        %v292 = vadd.f32 %v291, 1e-05
        %v293 = vrsqrt.pop %v292
        %v294 = vmul.f32 %v293, %v292
        %v295 = vmul.f32 %v294, %v293
        %v296 = vmul.f32 0.5, %v295
        %v297 = vsub.f32 1.5, %v296
        %v298 = vmul.f32 %v293, %v297
        %vm299 = vweird.f32 %v292
        %vm300 = vweird.f32 %v293
        %vm301 = vmor %vm299, %vm300
        %v302 = vsel %vm301, %v293, %v298
        %v303 = vld [vmem:[%s2] sm:$0xff]
        %v304 = vld [vmem:[%s2 + $0x8] sm:$0xff]
        %v305 = vmul.f32 %v302, %v303
        %307 = vset.pattern.permute.xlu0 0
        %308 = vperm.xlu0 %307, %v305
        %v309 = vpop.permute.xlu0 %308
        %v311 = vmul.f32 %v260, %v309
        %v312 = vmul.f32 %v261, %v309
        %v313 = vmul.f32 %v262, %v309
        %v314 = vmul.f32 %v263, %v309
        %v315 = vmul.f32 %v264, %v309
        %v316 = vmul.f32 %v265, %v309
        %v317 = vmul.f32 %v266, %v309
        %v318 = vmul.f32 %v267, %v309
        %320 = vset.pattern.permute.xlu0 0
        %321 = vperm.xlu0 %320, %v304
        %v322 = vpop.permute.xlu0 %321
        %v324 = vadd.f32 %v311, %v322
        %v325 = vadd.f32 %v312, %v322
        %v326 = vadd.f32 %v313, %v322
        %v327 = vadd.f32 %v314, %v322
        %v328 = vadd.f32 %v315, %v322
        %v329 = vadd.f32 %v316, %v322
        %v330 = vadd.f32 %v317, %v322
        %v331 = vadd.f32 %v318, %v322
        %v332 = vxor.u32 %v324, 2147483648
        %v333 = vxor.u32 %v325, 2147483648
        %v334 = vxor.u32 %v326, 2147483648
        %v335 = vxor.u32 %v327, 2147483648
        %v336 = vxor.u32 %v328, 2147483648
        %v337 = vxor.u32 %v329, 2147483648
        %v338 = vxor.u32 %v330, 2147483648
        %v339 = vxor.u32 %v331, 2147483648
        %v340 = vmul.f32 %v332, 1.442695
        %v341 = vpow.pop %v340
        %v342 = vmul.f32 %v333, 1.442695
        %v343 = vpow.pop %v342
        %v344 = vmul.f32 %v334, 1.442695
        %v345 = vpow.pop %v344
        %v346 = vmul.f32 %v335, 1.442695
        %v347 = vpow.pop %v346
        %v348 = vmul.f32 %v336, 1.442695
        %v349 = vpow.pop %v348
        %v350 = vmul.f32 %v337, 1.442695
        %v351 = vpow.pop %v350
        %v352 = vmul.f32 %v338, 1.442695
        %v353 = vpow.pop %v352
        %v354 = vmul.f32 %v339, 1.442695
        %v355 = vpow.pop %v354
        %v356 = vadd.f32 %v341, 1.0
        %v357 = vadd.f32 %v343, 1.0
        %v358 = vadd.f32 %v345, 1.0
        %v359 = vadd.f32 %v347, 1.0
        %v360 = vadd.f32 %v349, 1.0
        %v361 = vadd.f32 %v351, 1.0
        %v362 = vadd.f32 %v353, 1.0
        %v363 = vadd.f32 %v355, 1.0
        %v364 = vrcp.pop %v356
        %v365 = vmul.f32 %v356, %v364
        %v366 = vsub.f32 1.0, %v365
        %v367 = vmul.f32 %v364, %v366
        %v368 = vadd.f32 %v364, %v367
        %vm369 = vweird.f32 %v356
        %vm370 = vweird.f32 %v364
        %vm371 = vmor %vm369, %vm370
        %v372 = vsel %vm371, %v364, %v368
        %v373 = vand.u32 2147483647, %v356
        %vm374 = vcmp.eq.f32.partialorder %v373, 8.507059e+37
        %v375 = vand.u32 %v356, 2147483648
        %v376 = vor.u32 1.1754944e-38, %v375
        %v377 = vsel %vm374, %v376, %v372
        %v378 = vmul.f32 1.0, %v377
        %v379 = vrcp.pop %v357
        %v380 = vmul.f32 %v357, %v379
        %v381 = vsub.f32 1.0, %v380
        %v382 = vmul.f32 %v379, %v381
        %v383 = vadd.f32 %v379, %v382
        %vm384 = vweird.f32 %v357
        %vm385 = vweird.f32 %v379
        %vm386 = vmor %vm384, %vm385
        %v387 = vsel %vm386, %v379, %v383
        %v388 = vand.u32 2147483647, %v357
        %vm389 = vcmp.eq.f32.partialorder %v388, 8.507059e+37
        %v390 = vand.u32 %v357, 2147483648
        %v391 = vor.u32 1.1754944e-38, %v390
        %v392 = vsel %vm389, %v391, %v387
        %v393 = vmul.f32 1.0, %v392
        %v394 = vrcp.pop %v358
        %v395 = vmul.f32 %v358, %v394
        %v396 = vsub.f32 1.0, %v395
        %v397 = vmul.f32 %v394, %v396
        %v398 = vadd.f32 %v394, %v397
        %vm399 = vweird.f32 %v358
        %vm400 = vweird.f32 %v394
        %vm401 = vmor %vm399, %vm400
        %v402 = vsel %vm401, %v394, %v398
        %v403 = vand.u32 2147483647, %v358
        %vm404 = vcmp.eq.f32.partialorder %v403, 8.507059e+37
        %v405 = vand.u32 %v358, 2147483648
        %v406 = vor.u32 1.1754944e-38, %v405
        %v407 = vsel %vm404, %v406, %v402
        %v408 = vmul.f32 1.0, %v407
        %v409 = vrcp.pop %v359
        %v410 = vmul.f32 %v359, %v409
        %v411 = vsub.f32 1.0, %v410
        %v412 = vmul.f32 %v409, %v411
        %v413 = vadd.f32 %v409, %v412
        %vm414 = vweird.f32 %v359
        %vm415 = vweird.f32 %v409
        %vm416 = vmor %vm414, %vm415
        %v417 = vsel %vm416, %v409, %v413
        %v418 = vand.u32 2147483647, %v359
        %vm419 = vcmp.eq.f32.partialorder %v418, 8.507059e+37
        %v420 = vand.u32 %v359, 2147483648
        %v421 = vor.u32 1.1754944e-38, %v420
        %v422 = vsel %vm419, %v421, %v417
        %v423 = vmul.f32 1.0, %v422
        %v424 = vrcp.pop %v360
        %v425 = vmul.f32 %v360, %v424
        %v426 = vsub.f32 1.0, %v425
        %v427 = vmul.f32 %v424, %v426
        %v428 = vadd.f32 %v424, %v427
        %vm429 = vweird.f32 %v360
        %vm430 = vweird.f32 %v424
        %vm431 = vmor %vm429, %vm430
        %v432 = vsel %vm431, %v424, %v428
        %v433 = vand.u32 2147483647, %v360
        %vm434 = vcmp.eq.f32.partialorder %v433, 8.507059e+37
        %v435 = vand.u32 %v360, 2147483648
        %v436 = vor.u32 1.1754944e-38, %v435
        %v437 = vsel %vm434, %v436, %v432
        %v438 = vmul.f32 1.0, %v437
        %v439 = vrcp.pop %v361
        %v440 = vmul.f32 %v361, %v439
        %v441 = vsub.f32 1.0, %v440
        %v442 = vmul.f32 %v439, %v441
        %v443 = vadd.f32 %v439, %v442
        %vm444 = vweird.f32 %v361
        %vm445 = vweird.f32 %v439
        %vm446 = vmor %vm444, %vm445
        %v447 = vsel %vm446, %v439, %v443
        %v448 = vand.u32 2147483647, %v361
        %vm449 = vcmp.eq.f32.partialorder %v448, 8.507059e+37
        %v450 = vand.u32 %v361, 2147483648
        %v451 = vor.u32 1.1754944e-38, %v450
        %v452 = vsel %vm449, %v451, %v447
        %v453 = vmul.f32 1.0, %v452
        %v454 = vrcp.pop %v362
        %v455 = vmul.f32 %v362, %v454
        %v456 = vsub.f32 1.0, %v455
        %v457 = vmul.f32 %v454, %v456
        %v458 = vadd.f32 %v454, %v457
        %vm459 = vweird.f32 %v362
        %vm460 = vweird.f32 %v454
        %vm461 = vmor %vm459, %vm460
        %v462 = vsel %vm461, %v454, %v458
        %v463 = vand.u32 2147483647, %v362
        %vm464 = vcmp.eq.f32.partialorder %v463, 8.507059e+37
        %v465 = vand.u32 %v362, 2147483648
        %v466 = vor.u32 1.1754944e-38, %v465
        %v467 = vsel %vm464, %v466, %v462
        %v468 = vmul.f32 1.0, %v467
        %v469 = vrcp.pop %v363
        %v470 = vmul.f32 %v363, %v469
        %v471 = vsub.f32 1.0, %v470
        %v472 = vmul.f32 %v469, %v471
        %v473 = vadd.f32 %v469, %v472
        %vm474 = vweird.f32 %v363
        %vm475 = vweird.f32 %v469
        %vm476 = vmor %vm474, %vm475
        %v477 = vsel %vm476, %v469, %v473
        %v478 = vand.u32 2147483647, %v363
        %vm479 = vcmp.eq.f32.partialorder %v478, 8.507059e+37
        %v480 = vand.u32 %v363, 2147483648
        %v481 = vor.u32 1.1754944e-38, %v480
        %v482 = vsel %vm479, %v481, %v477
        %v483 = vmul.f32 1.0, %v482
        %v484 = vmul.f32 %v324, %v378
        %v485 = vmul.f32 %v325, %v393
        %v486 = vmul.f32 %v326, %v408
        %v487 = vmul.f32 %v327, %v423
        %v488 = vmul.f32 %v328, %v438
        %v489 = vmul.f32 %v329, %v453
        %v490 = vmul.f32 %v330, %v468
        %v491 = vmul.f32 %v331, %v483
        %v492 = vpack.c.bf16 %v485, %v484
        %v493 = vpack.c.bf16 %v487, %v486
        %v494 = vpack.c.bf16 %v489, %v488
        %v495 = vpack.c.bf16 %v491, %v490
        %496 = vst [vmem:[%s163] sm:$0xff] %v492
        %497 = vst [vmem:[%s163 + $0x8] sm:$0xff] %v493
        %498 = vst [vmem:[%s163 + $0x10] sm:$0xff] %v494
        %499 = vst [vmem:[%s163 + $0x18] sm:$0xff] %v495
        %s500 = sand.u32 %s93, 1
        %s501 = scalar_lea.sflag [#allocation3], %s500
        %s502 = sand.u32 %s93, 1
        %s503 = smul.addr %s502, 32
        %s504 = scalar_lea.vmem [#allocation2], %s503
        // Predicated region
        $region33: #{tpu_custom_call.1} parent=31 // pred_check
          %p505 = pneg %p103
        $region34: #{tpu_custom_call.1} parent=31 // pred_check_branch
          %507 = sbr.rel (%p505) target = $region36
        $region35: #{tpu_custom_call.1} parent=31 // pred_region
          %509 = vsyncadd %s501, 0
          %s510 = smul.addr %s17, 8
          %s511 = smul.addr %s510, 4
          %s512 = scalar_lea.hbm %s3, %s511
          %s513 = sshll.u32 %s504, 4
          %s514 = int_to_ptr.vmem [resolvable:$true] %s513
          %s515 = sshll.u32 %s512, 4
          %s516 = int_to_ptr.hbm [resolvable:$true] %s515
          %521 = dma.vmem_to_hbm [thread:$0]  %s514, 512, %s516, %s501, 128, 128, 8
        $region36: #{tpu_custom_call.1} parent=31 // pred_fallthru
          _
      $region32: #{tpu_custom_call.1} parent=5 // pred_fallthru
        _
      %p522 = scmp.le.s32.totalorder 2, %s12
      // Predicated region
      $region37: #{tpu_custom_call.1} parent=5 // pred_check
        %p523 = pneg %p522
      $region38: #{tpu_custom_call.1} parent=5 // pred_check_branch
        %525 = sbr.rel (%p523) target = $region40
      $region39: #{tpu_custom_call.1} parent=5 // pred_region
        %s526 = ssub.s32 %s12, 2
        // Predicated region
        $region41: #{tpu_custom_call.1} parent=39 // pred_check
          %p527 = pneg %p109
        $region42: #{tpu_custom_call.1} parent=39 // pred_check_branch
          %529 = sbr.rel (%p527) target = $region44
        $region43: #{tpu_custom_call.1} parent=39 // pred_region
          %s530 = sand.u32 %s94, 1
          %s531 = scalar_lea.sflag [#allocation3], %s530
          %s532 = sand.u32 %s94, 1
          %s533 = smul.addr %s532, 32
          %s534 = scalar_lea.vmem [#allocation2], %s533
          %536 = dma.done %s531, 512
        $region44: #{tpu_custom_call.1} parent=39 // pred_fallthru
          _
      $region40: #{tpu_custom_call.1} parent=5 // pred_fallthru
        _
    $region6: #{tpu_custom_call.1} parent=1 // loop_footer
      %s16 = sadd.s32 1, %s12
    $region7: #{tpu_custom_call.1} parent=1 // loop_footer_branch
      %11 = sbr.rel target = $region3
    $region8: #{tpu_custom_call.1} parent=1 // loop_exit
      _
    %537 = vsyncpa [#allocation3], 1
    %s538 = scalar_lea.sflag [#allocation3], 1
    %539 = vsyncpa %s538, 1

</llo_original>
